<compile_context>
chip_gen: v6e
topology: v6e:2x2x1
jax: 0.10.0
libtpu: 0.0.40
codegen_flags: <defaults>
</compile_context>

<pallas_src>
import math

import jax
import jax.numpy as jnp
from jax.experimental import pallas as pl
from jax.experimental.pallas import tpu as pltpu


def _round_up(x, m):
    return ((x + m - 1) // m) * m


# --------------------------------------------------------------------------
# Stage 1 kernel (used only for larger F_in): support = X @ W, row tiled
# --------------------------------------------------------------------------
def _support_kernel(x_ref, w_ref, s_ref):
    s_ref[...] = jnp.dot(
        x_ref[...], w_ref[...], preferred_element_type=jnp.float32
    ).astype(s_ref.dtype)


# --------------------------------------------------------------------------
# Stage 2 kernel factory: out = adj @ support + bias
#   - adj block is cast to compute_dtype per tile (no HBM pre-pass)
#   - f32 output block is the accumulator (constant index across k)
#   - support is either fully resident (sliced with pl.ds) or streamed
# --------------------------------------------------------------------------
def _make_adj_kernel(*, bk, num_k, support_resident, compute_dtype):
    def kernel(adj_ref, s_ref, b_ref, out_ref):
        k = pl.program_id(1)

        if support_resident and num_k > 1:
            start = pl.multiple_of(k * bk, 128)
            s_blk = s_ref[pl.ds(start, bk), :]
        else:
            s_blk = s_ref[...]

        adj_blk = adj_ref[...]
        if adj_blk.dtype != compute_dtype:
            adj_blk = adj_blk.astype(compute_dtype)  # per-tile cast, in VMEM

        partial = jnp.dot(adj_blk, s_blk, preferred_element_type=jnp.float32)

        if num_k == 1:
            # Whole contraction in one tile: no accumulator phases needed.
            out_ref[...] = partial + b_ref[...]
        else:
            @pl.when(k == 0)
            def _init():
                out_ref[...] = jnp.zeros_like(out_ref)

            out_ref[...] += partial

            @pl.when(k == num_k - 1)
            def _finalize():
                out_ref[...] += b_ref[...]

    return kernel


def _pick_first(candidates, pred):
    for c in candidates:
        if pred(c):
            return c
    return None


# --------------------------------------------------------------------------
# Wrapper
# --------------------------------------------------------------------------
def graph_convolution(x, adj, weight, bias=None, *, compute_dtype=None,
                      bm=None, bk=None, force_stream_support=False):
    """Fused GCN layer: adj @ (x @ weight) + bias.

    x:      [N, F_in]   node features
    adj:    [N, N]      dense adjacency (kept in its own dtype in HBM)
    weight: [F_in, F_out]
    bias:   [F_out] or None
    compute_dtype: matmul operand dtype (e.g. jnp.bfloat16 for 2x MXU
        throughput); adj is cast per-tile in-kernel, accumulation is float32.
    bm, bk: optional stage-2 tile-size overrides (must divide padded N).
    force_stream_support: disable the resident-support optimization (testing).
    """
    N, F_in = x.shape
    F_in_w, F_out = weight.shape
    assert F_in_w == F_in, "weight shape mismatch"
    assert adj.shape == (N, N), "adj must be [N, N]"

    if compute_dtype is None:
        compute_dtype = x.dtype
    compute_dtype = jnp.dtype(compute_dtype)
    sup_itemsize = compute_dtype.itemsize
    out_dtype = jnp.float32

    # ---- lane/sublane friendly padded sizes ------------------------------
    N_pad = _round_up(N, 128)
    F_out_p = _round_up(F_out, 128)

    # ---- adj: keep HBM dtype, zero-pad only if the edge is ragged ---------
    if N_pad != N:
        adjp = jnp.pad(adj, ((0, N_pad - N), (0, N_pad - N)))
    else:
        adjp = adj
    adj_itemsize = jnp.dtype(adjp.dtype).itemsize

    # ---- stage 1: support = X @ W  (padded to (N_pad, F_out_p)) -----------
    if F_in > 128:
        # Row-tiled Pallas kernel (K is big enough to be worth the MXU).
        xp = jnp.zeros((N_pad, F_in), compute_dtype).at[:N, :].set(
            x.astype(compute_dtype))
        wp = jnp.zeros((F_in, F_out_p), compute_dtype).at[:, :F_out].set(
            weight.astype(compute_dtype))
        bs = _pick_first((512, 256, 128),
                         lambda c: c <= N_pad and N_pad % c == 0) or N_pad
        support = pl.pallas_call(
            _support_kernel,
            out_shape=jax.ShapeDtypeStruct((N_pad, F_out_p), compute_dtype),
            grid_spec=pl.GridSpec(
                grid=(N_pad // bs,),
                in_specs=[
                    pl.BlockSpec((bs, F_in), lambda i: (i, 0)),
                    pl.BlockSpec((F_in, F_out_p), lambda i: (0, 0)),
                ],
                out_specs=pl.BlockSpec((bs, F_out_p), lambda i: (i, 0)),
            ),
            compiler_params=pltpu.CompilerParams(
                dimension_semantics=("parallel",)),
            cost_estimate=pl.CostEstimate(
                flops=2 * N_pad * F_in * F_out_p,
                transcendentals=0,
                bytes_accessed=(N_pad * F_in + F_in * F_out_p
                                + N_pad * F_out_p) * sup_itemsize),
        )(xp, wp)
    else:
        # K = F_in is MXU-starved and these FLOPs are negligible next to
        # adj @ support: a plain XLA dot avoids an extra kernel launch and
        # the separate x-padding pass.
        s = jnp.dot(x.astype(jnp.float32), weight.astype(jnp.float32),
                    precision=jax.lax.Precision.HIGHEST)
        support = jnp.zeros((N_pad, F_out_p), compute_dtype).at[:N, :F_out].set(
            s.astype(compute_dtype))

    # ---- bias (f32, lane-padded) -------------------------------------------
    bp = jnp.zeros((1, F_out_p), jnp.float32)
    if bias is not None:
        bp = bp.at[0, :F_out].set(bias.astype(jnp.float32))

    # ---- stage 2 tile selection under an explicit VMEM budget --------------
    BUDGET = 20 * 1024 * 1024          # double-buffered footprint target
    sup_resident_bytes = 2 * N_pad * F_out_p * sup_itemsize   # 2 pipeline bufs
    support_resident = (not force_stream_support and
                        sup_resident_bytes <= BUDGET // 2)

    def footprint(bm_, bk_):
        f = 2 * bm_ * bk_ * adj_itemsize          # adj blocks (HBM dtype)
        f += 2 * bm_ * F_out_p * 4                # resident f32 output block
        f += 2 * F_out_p * 4                      # bias
        if support_resident:
            f += sup_resident_bytes
        else:
            f += 2 * bk_ * F_out_p * sup_itemsize
        return f

    # keep >= 2 row tiles when possible so v7x's two TensorCores both work
    bm_cap = N_pad if N_pad <= 128 else N_pad // 2
    bm_cands = [c for c in (1024, 512, 256, 128)
                if c <= bm_cap and N_pad % c == 0] or [128]
    bk_cands = sorted({c for c in (N_pad, 4096, 2048, 1024, 512, 256, 128)
                       if c <= N_pad and N_pad % c == 0}, reverse=True)

    if bm is None:
        probe_bks = [bk] if bk is not None else bk_cands
        bm = _pick_first(
            bm_cands,
            lambda c: any(footprint(c, b) <= BUDGET for b in probe_bks)) or 128
    if bk is None:
        bk = _pick_first(bk_cands, lambda c: footprint(bm, c) <= BUDGET) or 128

    assert N_pad % bm == 0 and N_pad % bk == 0, "tiles must divide padded N"
    num_m = N_pad // bm
    num_k = N_pad // bk

    # Explicit scoped-VMEM limit: v5e defaults to 16 MiB, v6e/v7x to 32 MiB.
    vmem_limit = max(32 * 1024 * 1024, int(1.5 * footprint(bm, bk)))

    if support_resident:
        s_spec = pl.BlockSpec((N_pad, F_out_p), lambda i, k: (0, 0))
    else:
        s_spec = pl.BlockSpec((bk, F_out_p), lambda i, k: (k, 0))

    kernel = _make_adj_kernel(bk=bk, num_k=num_k,
                              support_resident=support_resident,
                              compute_dtype=compute_dtype)

    out_p = pl.pallas_call(
        kernel,
        out_shape=jax.ShapeDtypeStruct((N_pad, F_out_p), out_dtype),
        grid_spec=pl.GridSpec(
            grid=(num_m, num_k),
            in_specs=[
                pl.BlockSpec((bm, bk), lambda i, k: (i, k)),   # adj (HBM dtype)
                s_spec,                                        # support
                pl.BlockSpec((1, F_out_p), lambda i, k: (0, 0)),  # bias
            ],
            out_specs=pl.BlockSpec((bm, F_out_p), lambda i, k: (i, 0)),
        ),
        compiler_params=pltpu.CompilerParams(
            dimension_semantics=("parallel", "arbitrary"),
            vmem_limit_bytes=vmem_limit),
        cost_estimate=pl.CostEstimate(
            flops=2 * N_pad * N_pad * F_out_p,
            transcendentals=0,
            bytes_accessed=(N_pad * N_pad * adj_itemsize
                            + (1 if support_resident else num_m)
                            * N_pad * F_out_p * sup_itemsize
                            + N_pad * F_out_p * 4
                            + F_out_p * 4)),
    )(adjp, support, bp)

    return out_p[:N, :F_out]


# --------------------------------------------------------------------------
# Test / demo
# --------------------------------------------------------------------------
if __name__ == "__main__":
    key = jax.random.PRNGKey(0)

    def make_inputs(k, n, f_in, f_out):
        kx, kadj, kw, kb = jax.random.split(k, 4)
        x = jax.random.normal(kx, (n, f_in), dtype=jnp.float32)
        a = jax.random.uniform(kadj, (n, n), dtype=jnp.float32)
        adj = (a + a.T) * 0.5
        adj = adj / jnp.sum(adj, axis=1, keepdims=True)
        stdv = 1.0 / math.sqrt(f_out)
        w = jax.random.uniform(kw, (f_in, f_out), jnp.float32, -stdv, stdv)
        b = jax.random.uniform(kb, (f_out,), jnp.float32, -stdv, stdv)
        return x, adj, w, b

    def reference(x, adj, w, b):
        support = jnp.dot(x, w, precision=jax.lax.Precision.HIGHEST)
        out = jnp.dot(adj, support, precision=jax.lax.Precision.HIGHEST)
        return out + b

    k1, k2, k3 = jax.random.split(key, 3)

    # 1) module-default-ish small shapes (N=16, 8 -> 32), f32, single tile
    x, adj, w, b = make_inputs(k1, 16, 8, 32)
    out = jax.block_until_ready(graph_convolution(x, adj, w, b))
    ref = reference(x, adj, w, b)
    assert out.shape == (16, 32)
    assert jnp.allclose(out, ref, atol=2e-3, rtol=2e-3), "f32 small mismatch"

    # 2) non-aligned N, forced multi-k accumulation with streamed support
    x2, adj2, w2, b2 = make_inputs(k2, 300, 64, 96)
    out2 = jax.block_until_ready(
        graph_convolution(x2, adj2, w2, b2, bk=128, force_stream_support=True))
    ref2 = reference(x2, adj2, w2, b2)
    assert out2.shape == (300, 96)
    assert jnp.allclose(out2, ref2, atol=2e-3, rtol=2e-3), "f32 tiled mismatch"

    # 3) bf16 compute (adj cast per-tile in kernel), resident support + pl.ds
    out3 = jax.block_until_ready(
        graph_convolution(x2, adj2, w2, b2, compute_dtype=jnp.bfloat16, bk=128))
    assert out3.shape == (300, 96)
    assert jnp.allclose(out3, ref2, atol=5e-2, rtol=5e-2), "bf16 mismatch"

    # 4) larger F_in -> Pallas stage-1 kernel, collapsed-k stage 2, 2 row tiles
    x4, adj4, w4, b4 = make_inputs(k3, 512, 256, 192)
    out4 = jax.block_until_ready(
        graph_convolution(x4, adj4, w4, b4, compute_dtype=jnp.bfloat16))
    ref4 = reference(x4, adj4, w4, b4)
    assert out4.shape == (512, 192)
    assert jnp.allclose(out4, ref4, atol=5e-2, rtol=5e-2), "bf16 large mismatch"

    print("KERNEL_OK")
</pallas_src>

<mosaic_0001>
module attributes {stable_mosaic.version = 11 : i64} {
  func.func @kernel(%arg0: i32, %arg1: i32, %arg2: memref<128x128xf32, #tpu.memory_space<vmem>>, %arg3: memref<128x128xf32, #tpu.memory_space<vmem>>, %arg4: memref<1x128xf32, #tpu.memory_space<vmem>>, %arg5: memref<128x128xf32, #tpu.memory_space<vmem>>) attributes {dimension_semantics = [#tpu.dimension_semantics<parallel>, #tpu.dimension_semantics<arbitrary>], iteration_bounds = array<i64: 1, 1>, scalar_prefetch = 0 : i64, scratch_operands = 0 : i64, tpu.core_type = #tpu.core_type<tc>, window_params = [{transform_indices = @transform_0, window_bounds = array<i64: 128, 128>}, {pipeline_mode = #tpu.pipeline_mode<synchronous>, transform_indices = @transform_1, window_bounds = array<i64: 128, 128>}, {pipeline_mode = #tpu.pipeline_mode<synchronous>, transform_indices = @transform_2, window_bounds = array<i64: 1, 128>}, {transform_indices = @transform_3, window_bounds = array<i64: 128, 128>}]} {
    %c0 = arith.constant 0 : index
    %c0_0 = arith.constant 0 : index
    %0 = vector.load %arg3[%c0, %c0_0] : memref<128x128xf32, #tpu.memory_space<vmem>>, vector<128x128xf32>
    %c0_1 = arith.constant 0 : index
    %c0_2 = arith.constant 0 : index
    %1 = vector.load %arg2[%c0_1, %c0_2] : memref<128x128xf32, #tpu.memory_space<vmem>>, vector<128x128xf32>
    %cst = arith.constant dense<0.000000e+00> : vector<128x128xf32>
    %2 = tpu.matmul %1, %0, %cst {dimension_numbers = #tpu.dot_dimension_numbers<[1], [0], [0], [1], [0, 0, 1, 1], [], []>} : vector<128x128xf32>, vector<128x128xf32>, vector<128x128xf32> -> vector<128x128xf32>
    %c0_3 = arith.constant 0 : index
    %c0_4 = arith.constant 0 : index
    %3 = vector.load %arg4[%c0_3, %c0_4] : memref<1x128xf32, #tpu.memory_space<vmem>>, vector<1x128xf32>
    %4 = vector.broadcast %3 : vector<1x128xf32> to vector<128x128xf32>
    %5 = arith.addf %2, %4 : vector<128x128xf32>
    %c0_5 = arith.constant 0 : index
    %c0_6 = arith.constant 0 : index
    %6 = vector.load %arg5[%c0_5, %c0_6] : memref<128x128xf32, #tpu.memory_space<vmem>>, vector<128x128xf32>
    tpu.vector_store %arg5[%c0_5, %c0_6], %5 {strides = array<i32>} : memref<128x128xf32, #tpu.memory_space<vmem>>, vector<128x128xf32>,
    return
  }
  func.func @transform_0(%arg0: i32, %arg1: i32) -> (i32, i32) {
    %c0_i32 = arith.constant 0 : i32
    return %arg0, %arg1 : i32, i32
  }
  func.func @transform_1(%arg0: i32, %arg1: i32) -> (i32, i32) {
    %c0_i32 = arith.constant 0 : i32
    %c0_i32_0 = arith.constant 0 : i32
    %c0_i32_1 = arith.constant 0 : i32
    return %c0_i32, %c0_i32_0 : i32, i32
  }
  func.func @transform_2(%arg0: i32, %arg1: i32) -> (i32, i32) {
    %c0_i32 = arith.constant 0 : i32
    %c0_i32_0 = arith.constant 0 : i32
    %c0_i32_1 = arith.constant 0 : i32
    return %c0_i32, %c0_i32_0 : i32, i32
  }
  func.func @transform_3(%arg0: i32, %arg1: i32) -> (i32, i32) {
    %c0_i32 = arith.constant 0 : i32
    %c0_i32_0 = arith.constant 0 : i32
    return %arg0, %c0_i32 : i32, i32
  }
}

</mosaic_0001>

<llo_original>
// kernel: tpu_custom_call.1
$region0: #{tpu_custom_call.1}
  #allocation0 [shape = 'u32[]', space=smem, size = 0x4, offset = 0x4, fixed_abs, tag = 'smem constant byte address 0x4 - core index']
  #allocation1 [shape = 'u32[144,128]{1,0:T(1,128)}', space=vmem, size = 0x12000, scoped, tag = 'internal scratch']
  %s0 = inlined_call_operand.hbm [shape: f32[128,128], index: 0, kind: input, shape index: {}]
  %s1 = inlined_call_operand.hbm [shape: f32[128,128], index: 1, kind: input, shape index: {}]
  %s2 = inlined_call_operand.vmem [shape: f32[1,128], index: 2, kind: input, shape index: {}]
  %s3 = inlined_call_operand.hbm [shape: f32[128,128], index: 3, kind: output, shape index: {}]
  %s4 = sld [smem:[#allocation0]]
  $region30: #{tpu_custom_call.1} parent=0
    _
  %s6 = ssub.s32 1, %s4
  %s7 = scalar_select 0, %s6, %s4
  $region1: #{tpu_custom_call.1} parent=0
    #allocation2 [shape = 'u8[65536]{0}', space=vmem, size = 0x10000, scoped, tag = 'input window, operand 0, single buffered']
    #allocation3 [shape = 's32[1]{0}', space=sflag, size = 0x4, scoped, tag = 'scoped memory for tpu_custom_call.1']
    #allocation4 [shape = 's32[1]{0}', space=sflag, size = 0x4, scoped, tag = 'scoped memory for tpu_custom_call.1']
    #allocation5 [shape = 'u8[65536]{0}', space=vmem, size = 0x10000, scoped, tag = 'input window, operand 1, single buffered']
    #allocation6 [shape = 's32[1]{0}', space=sflag, size = 0x4, scoped, tag = 'scoped memory for tpu_custom_call.1']
    #allocation7 [shape = 'u8[65536]{0}', space=vmem, size = 0x10000, scoped, tag = 'output window, operand 0, single buffered']
    %8 = vsyncpa [#allocation3], 0
    %9 = vsyncpa [#allocation6], 0
    %10 = vsyncpa [#allocation4], 0
    // Predicated region
    $region2: #{tpu_custom_call.1} parent=1 // pred_check
      _
    $region3: #{tpu_custom_call.1} parent=1 // pred_check_branch
      %12 = sbr.rel (0) target = $region5
    $region4: #{tpu_custom_call.1} parent=1 // pred_region
      %s14 = ssub.s32 2048, 2048
      %15 = vsyncadd [#allocation3], %s14
      %s16 = sshll.u32 [#allocation2], 4
      %s17 = int_to_ptr.vmem [resolvable:$true] %s16
      %22 = dma.hbm_to_vmem [thread:$0]  %s0, 2048, %s17, [#allocation3], 128, 128, 8
    $region5: #{tpu_custom_call.1} parent=1 // pred_fallthru
      _
    // Predicated region
    $region6: #{tpu_custom_call.1} parent=1 // pred_check
      _
    $region7: #{tpu_custom_call.1} parent=1 // pred_check_branch
      %24 = sbr.rel (0) target = $region9
    $region8: #{tpu_custom_call.1} parent=1 // pred_region
      %s26 = ssub.s32 2048, 2048
      %27 = vsyncadd [#allocation6], %s26
      %s28 = sshll.u32 [#allocation5], 4
      %s29 = int_to_ptr.vmem [resolvable:$true] %s28
      %34 = dma.hbm_to_vmem [thread:$0]  %s1, 2048, %s29, [#allocation6], 128, 128, 8
    $region9: #{tpu_custom_call.1} parent=1 // pred_fallthru
      _
    // Predicated region
    $region10: #{tpu_custom_call.1} parent=1 // pred_check
      _
    $region11: #{tpu_custom_call.1} parent=1 // pred_check_branch
      %36 = sbr.rel (0) target = $region13
    $region12: #{tpu_custom_call.1} parent=1 // pred_region
      _
    $region13: #{tpu_custom_call.1} parent=1 // pred_fallthru
      _
    // Predicated region
    $region14: #{tpu_custom_call.1} parent=1 // pred_check
      _
    $region15: #{tpu_custom_call.1} parent=1 // pred_check_branch
      %38 = sbr.rel (0) target = $region17
    $region16: #{tpu_custom_call.1} parent=1 // pred_region
      %39 = dma.done [#allocation3], 2048
    $region17: #{tpu_custom_call.1} parent=1 // pred_fallthru
      _
    // Predicated region
    $region18: #{tpu_custom_call.1} parent=1 // pred_check
      _
    $region19: #{tpu_custom_call.1} parent=1 // pred_check_branch
      %41 = sbr.rel (0) target = $region21
    $region20: #{tpu_custom_call.1} parent=1 // pred_region
      %42 = dma.done [#allocation6], 2048
    $region21: #{tpu_custom_call.1} parent=1 // pred_fallthru
      _
    %v43 = vld [vmem:[#allocation5] sm:$0xff]
    %v44 = vld [vmem:[#allocation5 + $0x8] sm:$0xff]
    %v45 = vld [vmem:[#allocation5 + $0x10] sm:$0xff]
    %v46 = vld [vmem:[#allocation5 + $0x18] sm:$0xff]
    %v47 = vld [vmem:[#allocation5 + $0x20] sm:$0xff]
    %v48 = vld [vmem:[#allocation5 + $0x28] sm:$0xff]
    %v49 = vld [vmem:[#allocation5 + $0x30] sm:$0xff]
    %v50 = vld [vmem:[#allocation5 + $0x38] sm:$0xff]
    %v51 = vld [vmem:[#allocation5 + $0x40] sm:$0xff]
    %v52 = vld [vmem:[#allocation5 + $0x48] sm:$0xff]
    %v53 = vld [vmem:[#allocation5 + $0x50] sm:$0xff]
    %v54 = vld [vmem:[#allocation5 + $0x58] sm:$0xff]
    %v55 = vld [vmem:[#allocation5 + $0x60] sm:$0xff]
    %v56 = vld [vmem:[#allocation5 + $0x68] sm:$0xff]
    %v57 = vld [vmem:[#allocation5 + $0x70] sm:$0xff]
    %v58 = vld [vmem:[#allocation5 + $0x78] sm:$0xff]
    %v59 = vld [vmem:[#allocation2] sm:$0xff]
    %v60 = vld [vmem:[#allocation2 + $0x8] sm:$0xff]
    %v61 = vld [vmem:[#allocation2 + $0x10] sm:$0xff]
    %v62 = vld [vmem:[#allocation2 + $0x18] sm:$0xff]
    %v63 = vld [vmem:[#allocation2 + $0x20] sm:$0xff]
    %v64 = vld [vmem:[#allocation2 + $0x28] sm:$0xff]
    %v65 = vld [vmem:[#allocation2 + $0x30] sm:$0xff]
    %v66 = vld [vmem:[#allocation2 + $0x38] sm:$0xff]
    %v67 = vld [vmem:[#allocation2 + $0x40] sm:$0xff]
    %v68 = vld [vmem:[#allocation2 + $0x48] sm:$0xff]
    %v69 = vld [vmem:[#allocation2 + $0x50] sm:$0xff]
    %v70 = vld [vmem:[#allocation2 + $0x58] sm:$0xff]
    %v71 = vld [vmem:[#allocation2 + $0x60] sm:$0xff]
    %v72 = vld [vmem:[#allocation2 + $0x68] sm:$0xff]
    %v73 = vld [vmem:[#allocation2 + $0x70] sm:$0xff]
    %v74 = vld [vmem:[#allocation2 + $0x78] sm:$0xff]
    %v75 = vld [vmem:[%s2] sm:$0x1]
    %v77 = vlaneseq
    %v78 = vshrl.u32 %v77, 7
    %v79 = vsub.s32 0, %v78
    %v80 = vrot.slane %v75, %v79
    %82 = vmatprep.subr.mxu0 0.0
    %83 = vmatpush1.msra.mxu0 %v58
    %84 = vmatprep.subr.mxu0 0.0
    %85 = vmatpush1.msra.mxu0 %v57
    %86 = vmatprep.subr.mxu0 0.0
    %87 = vmatpush1.msra.mxu0 %v56
    %88 = vmatprep.subr.mxu0 0.0
    %89 = vmatpush1.msra.mxu0 %v55
    %90 = vmatprep.subr.mxu0 0.0
    %91 = vmatpush1.msra.mxu0 %v54
    %92 = vmatprep.subr.mxu0 0.0
    %93 = vmatpush1.msra.mxu0 %v53
    %94 = vmatprep.subr.mxu0 0.0
    %95 = vmatpush1.msra.mxu0 %v52
    %96 = vmatprep.subr.mxu0 0.0
    %97 = vmatpush1.msra.mxu0 %v51
    %98 = vmatprep.subr.mxu0 0.0
    %99 = vmatpush1.msra.mxu0 %v50
    %100 = vmatprep.subr.mxu0 0.0
    %101 = vmatpush1.msra.mxu0 %v49
    %102 = vmatprep.subr.mxu0 0.0
    %103 = vmatpush1.msra.mxu0 %v48
    %104 = vmatprep.subr.mxu0 0.0
    %105 = vmatpush1.msra.mxu0 %v47
    %106 = vmatprep.subr.mxu0 0.0
    %107 = vmatpush1.msra.mxu0 %v46
    %108 = vmatprep.subr.mxu0 0.0
    %109 = vmatpush1.msra.mxu0 %v45
    %110 = vmatprep.subr.mxu0 0.0
    %111 = vmatpush1.msra.mxu0 %v44
    %112 = vmatprep.subr.mxu0 0.0
    %113 = vmatpush1.msra.mxu0 %v43
    %114 = vmatprep.subr.mxu0 0.0
    %115 = vmatpush2.msra.mxu0 0.0
    %116 = vmatprep.subr.mxu0 0.0
    %117 = vmatpush2.msra.mxu0 0.0
    %118 = vmatprep.subr.mxu0 0.0
    %119 = vmatpush2.msra.mxu0 0.0
    %120 = vmatprep.subr.mxu0 0.0
    %121 = vmatpush2.msra.mxu0 0.0
    %122 = vmatprep.subr.mxu0 0.0
    %123 = vmatpush2.msra.mxu0 0.0
    %124 = vmatprep.subr.mxu0 0.0
    %125 = vmatpush2.msra.mxu0 0.0
    %126 = vmatprep.subr.mxu0 0.0
    %127 = vmatpush2.msra.mxu0 0.0
    %128 = vmatprep.subr.mxu0 0.0
    %129 = vmatpush2.msra.mxu0 0.0
    %130 = vmatprep.subr.mxu0 0.0
    %131 = vmatpush2.msra.mxu0 0.0
    %132 = vmatprep.subr.mxu0 0.0
    %133 = vmatpush2.msra.mxu0 0.0
    %134 = vmatprep.subr.mxu0 0.0
    %135 = vmatpush2.msra.mxu0 0.0
    %136 = vmatprep.subr.mxu0 0.0
    %137 = vmatpush2.msra.mxu0 0.0
    %138 = vmatprep.subr.mxu0 0.0
    %139 = vmatpush2.msra.mxu0 0.0
    %140 = vmatprep.subr.mxu0 0.0
    %141 = vmatpush2.msra.mxu0 0.0
    %142 = vmatprep.subr.mxu0 0.0
    %143 = vmatpush2.msra.mxu0 0.0
    %144 = vmatprep.subr.mxu0 0.0
    %145 = vmatpush2.msra.mxu0 0.0
    %146 = vmatprep.mubr.f32.mxu0 0.0
    %147 = vmatmul.mubr.f32.gmra.mxu0 %v59
    %v148 = vpop.f32.mrf.mxu0
    %v149 = vadd.f32 %v80, %v148
    %v150 = vpop.f32.mrf.mxu0
    %151 = vmatprep.mubr.f32.mxu0 0.0
    %152 = vmatmul.mubr.f32.gmra.mxu0 %v60
    %v153 = vpop.f32.mrf.mxu0
    %v154 = vadd.f32 %v80, %v153
    %v155 = vpop.f32.mrf.mxu0
    %156 = vmatprep.mubr.f32.mxu0 0.0
    %157 = vmatmul.mubr.f32.gmra.mxu0 %v61
    %v158 = vpop.f32.mrf.mxu0
    %v159 = vadd.f32 %v80, %v158
    %v160 = vpop.f32.mrf.mxu0
    %161 = vmatprep.mubr.f32.mxu0 0.0
    %162 = vmatmul.mubr.f32.gmra.mxu0 %v62
    %v163 = vpop.f32.mrf.mxu0
    %v164 = vadd.f32 %v80, %v163
    %v165 = vpop.f32.mrf.mxu0
    %166 = vmatprep.mubr.f32.mxu0 0.0
    %167 = vmatmul.mubr.f32.gmra.mxu0 %v63
    %v168 = vpop.f32.mrf.mxu0
    %v169 = vadd.f32 %v80, %v168
    %v170 = vpop.f32.mrf.mxu0
    %171 = vmatprep.mubr.f32.mxu0 0.0
    %172 = vmatmul.mubr.f32.gmra.mxu0 %v64
    %v173 = vpop.f32.mrf.mxu0
    %v174 = vadd.f32 %v80, %v173
    %v175 = vpop.f32.mrf.mxu0
    %176 = vmatprep.mubr.f32.mxu0 0.0
    %177 = vmatmul.mubr.f32.gmra.mxu0 %v65
    %v178 = vpop.f32.mrf.mxu0
    %v179 = vadd.f32 %v80, %v178
    %v180 = vpop.f32.mrf.mxu0
    %181 = vmatprep.mubr.f32.mxu0 0.0
    %182 = vmatmul.mubr.f32.gmra.mxu0 %v66
    %v183 = vpop.f32.mrf.mxu0
    %v184 = vadd.f32 %v80, %v183
    %v185 = vpop.f32.mrf.mxu0
    %186 = vmatprep.mubr.f32.mxu0 0.0
    %187 = vmatmul.mubr.f32.gmra.mxu0 %v67
    %v188 = vpop.f32.mrf.mxu0
    %v189 = vadd.f32 %v80, %v188
    %v190 = vpop.f32.mrf.mxu0
    %191 = vmatprep.mubr.f32.mxu0 0.0
    %192 = vmatmul.mubr.f32.gmra.mxu0 %v68
    %v193 = vpop.f32.mrf.mxu0
    %v194 = vadd.f32 %v80, %v193
    %v195 = vpop.f32.mrf.mxu0
    %196 = vmatprep.mubr.f32.mxu0 0.0
    %197 = vmatmul.mubr.f32.gmra.mxu0 %v69
    %v198 = vpop.f32.mrf.mxu0
    %v199 = vadd.f32 %v80, %v198
    %v200 = vpop.f32.mrf.mxu0
    %201 = vmatprep.mubr.f32.mxu0 0.0
    %202 = vmatmul.mubr.f32.gmra.mxu0 %v70
    %v203 = vpop.f32.mrf.mxu0
    %v204 = vadd.f32 %v80, %v203
    %v205 = vpop.f32.mrf.mxu0
    %206 = vmatprep.mubr.f32.mxu0 0.0
    %207 = vmatmul.mubr.f32.gmra.mxu0 %v71
    %v208 = vpop.f32.mrf.mxu0
    %v209 = vadd.f32 %v80, %v208
    %v210 = vpop.f32.mrf.mxu0
    %211 = vmatprep.mubr.f32.mxu0 0.0
    %212 = vmatmul.mubr.f32.gmra.mxu0 %v72
    %v213 = vpop.f32.mrf.mxu0
    %v214 = vadd.f32 %v80, %v213
    %v215 = vpop.f32.mrf.mxu0
    %216 = vmatprep.mubr.f32.mxu0 0.0
    %217 = vmatmul.mubr.f32.gmra.mxu0 %v73
    %v218 = vpop.f32.mrf.mxu0
    %v219 = vadd.f32 %v80, %v218
    %v220 = vpop.f32.mrf.mxu0
    %221 = vmatprep.mubr.f32.mxu0 0.0
    %222 = vmatmul.mubr.f32.gmra.mxu0 %v74
    %v223 = vpop.f32.mrf.mxu0
    %v224 = vadd.f32 %v80, %v223
    %v225 = vpop.f32.mrf.mxu0
    %226 = vdwg.mxu0
    %227 = vst [vmem:[#allocation7] sm:$0xff] %v149
    %228 = vst [vmem:[#allocation7 + $0x8] sm:$0xff] %v154
    %229 = vst [vmem:[#allocation7 + $0x10] sm:$0xff] %v159
    %230 = vst [vmem:[#allocation7 + $0x18] sm:$0xff] %v164
    %231 = vst [vmem:[#allocation7 + $0x20] sm:$0xff] %v169
    %232 = vst [vmem:[#allocation7 + $0x28] sm:$0xff] %v174
    %233 = vst [vmem:[#allocation7 + $0x30] sm:$0xff] %v179
    %234 = vst [vmem:[#allocation7 + $0x38] sm:$0xff] %v184
    %235 = vst [vmem:[#allocation7 + $0x40] sm:$0xff] %v189
    %236 = vst [vmem:[#allocation7 + $0x48] sm:$0xff] %v194
    %237 = vst [vmem:[#allocation7 + $0x50] sm:$0xff] %v199
    %238 = vst [vmem:[#allocation7 + $0x58] sm:$0xff] %v204
    %239 = vst [vmem:[#allocation7 + $0x60] sm:$0xff] %v209
    %240 = vst [vmem:[#allocation7 + $0x68] sm:$0xff] %v214
    %241 = vst [vmem:[#allocation7 + $0x70] sm:$0xff] %v219
    %242 = vst [vmem:[#allocation7 + $0x78] sm:$0xff] %v224
    // Predicated region
    $region22: #{tpu_custom_call.1} parent=1 // pred_check
      _
    $region23: #{tpu_custom_call.1} parent=1 // pred_check_branch
      %244 = sbr.rel (0) target = $region25
    $region24: #{tpu_custom_call.1} parent=1 // pred_region
      %s246 = ssub.s32 2048, 2048
      %247 = vsyncadd [#allocation4], %s246
      %s248 = sshll.u32 [#allocation7], 4
      %s249 = int_to_ptr.vmem [resolvable:$true] %s248
      %254 = dma.vmem_to_hbm [thread:$0]  %s249, 2048, %s3, [#allocation4], 128, 128, 8
    $region25: #{tpu_custom_call.1} parent=1 // pred_fallthru
      _
    // Predicated region
    $region26: #{tpu_custom_call.1} parent=1 // pred_check
      _
    $region27: #{tpu_custom_call.1} parent=1 // pred_check_branch
      %256 = sbr.rel (0) target = $region29
    $region28: #{tpu_custom_call.1} parent=1 // pred_region
      %257 = dma.done [#allocation4], 2048
    $region29: #{tpu_custom_call.1} parent=1 // pred_fallthru
      _
    %258 = vsyncpa [#allocation3], 1
    %259 = vsyncpa [#allocation6], 1
    %260 = vsyncpa [#allocation4], 1

</llo_original>
